<compile_context>
chip_gen: v7x
topology: tpu7x:2x2x1
jax: 0.10.0
libtpu: 0.0.40
codegen_flags: <defaults>
</compile_context>

<pallas_src>
import functools

import jax
import jax.numpy as jnp
from jax.experimental import pallas as pl
from jax.experimental.pallas import tpu as pltpu


# --------------------------------------------------------------------------- #
# Kernel
# --------------------------------------------------------------------------- #
def _unit_norm_kernel(x_ref, o_ref, *, eps):
    # x_ref block: (TILE_ROWS, M) — L2-normalize each row.
    x = x_ref[...]
    xf = x.astype(jnp.float32)                              # f32 accumulation
    ssq = jnp.sum(xf * xf, axis=-1, keepdims=True)          # (TILE_ROWS, 1)
    # rsqrt(max(ssq, eps^2)) == 1 / max(sqrt(ssq), eps)  (F.normalize clamp),
    # one EUP op per row instead of sqrt + divide.
    inv = jax.lax.rsqrt(jnp.maximum(ssq, eps * eps))
    # Scale in the native dtype (no staged f32 tile for bf16 inputs).
    o_ref[...] = (x * inv.astype(x.dtype)).astype(o_ref.dtype)


# --------------------------------------------------------------------------- #
# Generation-aware tiling
# --------------------------------------------------------------------------- #
def _pad8(v):
    return max(8, ((v + 7) // 8) * 8)


def _tiling_params():
    try:
        vmem = int(pltpu.get_tpu_info().vmem_capacity_bytes)
    except Exception:  # non-TPU / interpret fallback
        vmem = 128 << 20
    if vmem <= (96 << 20):
        # v7x-class TensorCore: 64 MiB VMEM, 2 TCs/chip.
        return dict(target_block_bytes=6 << 20,
                    vmem_limit_bytes=min(48 << 20, (vmem * 3) // 4),
                    prefer_even_grid=True)
    # v5e / v6e: 128 MiB VMEM (v5e default scoped limit is only 16 MiB -> raise).
    return dict(target_block_bytes=8 << 20,
                vmem_limit_bytes=64 << 20,
                prefer_even_grid=False)


def _choose_tile_rows(n_rows, row_bytes, target_bytes, prefer_even_grid):
    """Largest multiple-of-8 row tile within the byte budget (2x in + 2x out
    double-buffered blocks stay well inside the scoped VMEM limit)."""
    cap = (target_bytes // max(row_bytes, 1)) // 8 * 8
    cap = max(8, min(4096, cap))                    # byte-based cap (not 1024 rows)
    tile = min(cap, _pad8(n_rows))
    if n_rows >= 8:
        tile = min(tile, (n_rows // 8) * 8)         # keep block <= array rows
    if prefer_even_grid:
        # Keep both v7x TensorCores busy: >= 2 (ideally even) grid steps.
        if tile * 1 >= n_rows and n_rows >= 16:
            tile = min(tile, _pad8(pl.cdiv(n_rows, 2)))
        steps = pl.cdiv(n_rows, tile)
        if steps > 1 and steps % 2 == 1:
            tile = _pad8(pl.cdiv(n_rows, steps + 1))
    return tile


# --------------------------------------------------------------------------- #
# pallas_call wrapper
# --------------------------------------------------------------------------- #
def _unit_norm_2d(x2d, eps=1e-12, tile_rows=None):
    """x2d: (N, M) — L2-normalize each row. Returns (N, M)."""
    n, m = x2d.shape
    row_bytes = m * jnp.dtype(x2d.dtype).itemsize
    params = _tiling_params()
    if tile_rows is None:
        tile_rows = _choose_tile_rows(n, row_bytes,
                                      params["target_block_bytes"],
                                      params["prefer_even_grid"])

    grid = (pl.cdiv(n, tile_rows),)                 # partial last block handled by Pallas
    kernel = functools.partial(_unit_norm_kernel, eps=eps)

    return pl.pallas_call(
        kernel,
        out_shape=jax.ShapeDtypeStruct((n, m), x2d.dtype),
        grid_spec=pl.GridSpec(
            grid=grid,
            in_specs=[pl.BlockSpec((tile_rows, m), lambda i: (i, 0))],
            out_specs=pl.BlockSpec((tile_rows, m), lambda i: (i, 0)),
        ),
        compiler_params=pltpu.CompilerParams(
            dimension_semantics=("parallel",),
            vmem_limit_bytes=params["vmem_limit_bytes"]),
        cost_estimate=pl.CostEstimate(
            flops=3 * n * m,                         # square, reduce-add, scale
            transcendentals=n,                       # one rsqrt per row
            bytes_accessed=2 * n * row_bytes),
    )(x2d)


def unit_norm_forward(x, dim=1, eps=1e-12, tile_rows=None):
    """Pallas equivalent of UnitNormLayer.forward: F.normalize(x, p=2, dim=dim).

    The normalized axis is placed on the lane (last) axis and remaining axes are
    flattened into rows. For M not a multiple of 128, prefer zero-padding the
    feature dim upstream (zero columns don't change the norm) to keep stores
    lane-dense.
    """
    # TODO(synk): for dim != last axis on >2-D inputs this still pays two HBM
    # transposes (moveaxis) around the kernel; a sublane-axis reduction variant
    # would avoid them. The module's documented N x M / dim=1 case hits the
    # transpose-free path.
    dim = dim % x.ndim
    moved = dim != x.ndim - 1
    xt = jnp.moveaxis(x, dim, -1) if moved else x
    flat = xt.reshape(-1, xt.shape[-1])
    out = _unit_norm_2d(flat, eps=eps, tile_rows=tile_rows)
    out = out.reshape(xt.shape)
    if moved:
        out = jnp.moveaxis(out, -1, dim)
    return out


def reference_forward(x, dim=1, eps=1e-12):
    norm = jnp.sqrt(jnp.sum(x * x, axis=dim, keepdims=True))
    return x / jnp.maximum(norm, eps)


# --------------------------------------------------------------------------- #
# Self-test
# --------------------------------------------------------------------------- #
if __name__ == "__main__":
    # N x M batch as the module docstring implies; N=20 exercises the partial
    # (masked) last block now that wrapper-side padding has been removed.
    N, M = 20, 128
    key = jax.random.PRNGKey(0)
    x = jax.random.normal(key, (N, M), dtype=jnp.float32)

    out = jax.block_until_ready(unit_norm_forward(x, dim=1))
    ref = reference_forward(x, dim=1)
    assert out.shape == (N, M)
    assert jnp.allclose(out, ref, atol=1e-5, rtol=1e-5)
    assert jnp.allclose(jnp.linalg.norm(out, axis=1), 1.0, atol=1e-4)

    # bf16 path: f32 sum-of-squares accumulation, native-dtype scale (no staged
    # f32 tile in VMEM).
    xb = jax.random.normal(jax.random.PRNGKey(1), (32, 256), dtype=jnp.bfloat16)
    outb = jax.block_until_ready(unit_norm_forward(xb, dim=1))
    refb = reference_forward(xb.astype(jnp.float32), dim=1)
    assert jnp.allclose(outb.astype(jnp.float32), refb, atol=2e-2, rtol=2e-2)

    print("KERNEL_OK")
</pallas_src>

<mosaic_0001>
module attributes {stable_mosaic.version = 11 : i64} {
  func.func @_unit_norm_kernel(%arg0: i32, %arg1: memref<16x128xf32, #tpu.memory_space<vmem>>, %arg2: memref<16x128xf32, #tpu.memory_space<vmem>>) attributes {dimension_semantics = [#tpu.dimension_semantics<parallel>], iteration_bounds = array<i64: 2>, scalar_prefetch = 0 : i64, scratch_operands = 0 : i64, tpu.core_type = #tpu.core_type<tc>, window_params = [{transform_indices = @transform_0, window_bounds = array<i64: 16, 128>}, {transform_indices = @transform_1, window_bounds = array<i64: 16, 128>}]} {
    %c0 = arith.constant 0 : index
    %c0_0 = arith.constant 0 : index
    %0 = vector.load %arg1[%c0, %c0_0] : memref<16x128xf32, #tpu.memory_space<vmem>>, vector<16x128xf32>
    %1 = arith.mulf %0, %0 : vector<16x128xf32>
    %cst = arith.constant dense<0.000000e+00> : vector<16xf32>
    %2 = vector.multi_reduction <add>, %1, %cst [1] : vector<16x128xf32> to vector<16xf32>
    %3 = vector.shape_cast %2 : vector<16xf32> to vector<16x1xf32>
    %cst_1 = arith.constant 1.000000e-24 : f32
    %4 = vector.broadcast %cst_1 : f32 to vector<16x1xf32>
    %5 = arith.maximumf %3, %4 : vector<16x1xf32>
    %6 = math.rsqrt %5 : vector<16x1xf32>
    %7 = vector.broadcast %6 : vector<16x1xf32> to vector<16x128xf32>
    %8 = arith.mulf %0, %7 : vector<16x128xf32>
    %c0_2 = arith.constant 0 : index
    %c0_3 = arith.constant 0 : index
    %9 = vector.load %arg2[%c0_2, %c0_3] : memref<16x128xf32, #tpu.memory_space<vmem>>, vector<16x128xf32>
    tpu.vector_store %arg2[%c0_2, %c0_3], %8 {strides = array<i32>} : memref<16x128xf32, #tpu.memory_space<vmem>>, vector<16x128xf32>,
    return
  }
  func.func @transform_0(%arg0: i32) -> (i32, i32) {
    %c0_i32 = arith.constant 0 : i32
    %c0_i32_0 = arith.constant 0 : i32
    return %arg0, %c0_i32 : i32, i32
  }
  func.func @transform_1(%arg0: i32) -> (i32, i32) {
    %c0_i32 = arith.constant 0 : i32
    %c0_i32_0 = arith.constant 0 : i32
    return %arg0, %c0_i32 : i32, i32
  }
}

</mosaic_0001>

<llo_original>
// kernel: tpu_custom_call.1
$region0: #{tpu_custom_call.1}
  #allocation0 [shape = 'u32[]', space=smem, size = 0x4, offset = 0x4, fixed_abs, tag = 'smem constant byte address 0x4 - core index']
  #allocation1 [shape = 'u32[144,128]{1,0:T(1,128)}', space=vmem, size = 0x12000, scoped, tag = 'internal scratch']
  %s0 = inlined_call_operand.hbm [shape: f32[20,128], index: 0, kind: input, shape index: {}]
  %s1 = inlined_call_operand.hbm [shape: f32[20,128], index: 1, kind: output, shape index: {}]
  %s2 = sld [smem:[#allocation0]]
  $region41: #{tpu_custom_call.1} parent=0
    _
  %s4 = ssub.s32 1, %s2
  %s5 = scalar_select 0, %s4, %s2
  $region1: #{tpu_custom_call.1} parent=0
    #allocation2 [shape = 'u8[16384]{0}', space=vmem, size = 0x4000, scoped, tag = 'input window, operand 0']
    #allocation3 [shape = 's32[2]{0}', space=sflag, size = 0x8, scoped, tag = 'scoped memory for tpu_custom_call.1']
    #allocation4 [shape = 's32[2]{0}', space=sflag, size = 0x8, scoped, tag = 'scoped memory for tpu_custom_call.1']
    #allocation5 [shape = 'u8[16384]{0}', space=vmem, size = 0x4000, scoped, tag = 'output window, operand 0']
    %6 = vsyncpa [#allocation3], 0
    %s7 = scalar_lea.sflag [#allocation3], 1
    %8 = vsyncpa %s7, 0
    %9 = vsyncpa [#allocation4], 0
    %s10 = scalar_lea.sflag [#allocation4], 1
    %11 = vsyncpa %s10, 0
    loop: start=0, step=1, limit=4
    $region2: #{tpu_custom_call.1} parent=1 // loop_pre_header
      _
    $region3: #{tpu_custom_call.1} parent=1 // loop_header
      %s13 = sphi 0, %s17
      %p14 = scmp.ge.s32.totalorder %s13, 4
      %s23 = sphi 0, %s25
      %s26 = sphi 0, %s23
      %s27 = sphi 0, %s26
      %s43 = sphi 0, %s27
      %s49 = sphi 0, %s51
      %s52 = sphi 0, %s49
      %s53 = sphi 0, %s52
      %s69 = sphi 0, %s53
    $region4: #{tpu_custom_call.1} parent=1 // loop_header_branch
      %16 = sbr.rel (%p14) target = $region8
    $region5: #{tpu_custom_call.1} parent=1 // loop_body
      %s18 = ssub.s32 %s13, 1
      %s19 = ssub.s32 %s13, 2
      %s20 = sadd.s32 %s13, 1
      %s21 = ssub.s32 %s13, %s20
      %p22 = scmp.eq.s32.totalorder %s21, 0
      %s24 = sadd.s32 %s23, 1
      %s25 = scalar_select %p22, %s23, %s24
      %p28 = pneg %p22
      %p29 = scmp.eq.s32.totalorder %s13, 1
      %p30 = por %p28, %p29
      %p31 = scmp.ne.s32.totalorder %s23, %s26
      %p32 = scmp.eq.s32.totalorder %s13, 0
      %p33 = por %p31, %p32
      %p34 = scmp.ne.s32.totalorder %s23, %s26
      %p35 = scmp.eq.s32.totalorder %s18, 1
      %p36 = por %p34, %p35
      %p37 = scmp.ne.s32.totalorder %s26, %s27
      %p38 = scmp.eq.s32.totalorder %s18, 0
      %p39 = por %p37, %p38
      %p40 = scmp.ne.s32.totalorder %s26, %s27
      %p41 = scmp.eq.s32.totalorder %s19, 1
      %p42 = por %p40, %p41
      %p44 = scmp.ne.s32.totalorder %s27, %s43
      %p45 = scmp.eq.s32.totalorder %s19, 0
      %p46 = por %p44, %p45
      %s47 = ssub.s32 %s13, %s20
      %p48 = scmp.eq.s32.totalorder %s47, 0
      %s50 = sadd.s32 %s49, 1
      %s51 = scalar_select %p48, %s49, %s50
      %p54 = pneg %p48
      %p55 = scmp.eq.s32.totalorder %s13, 1
      %p56 = por %p54, %p55
      %p57 = scmp.ne.s32.totalorder %s49, %s52
      %p58 = scmp.eq.s32.totalorder %s13, 0
      %p59 = por %p57, %p58
      %p60 = scmp.ne.s32.totalorder %s49, %s52
      %p61 = scmp.eq.s32.totalorder %s18, 1
      %p62 = por %p60, %p61
      %p63 = scmp.ne.s32.totalorder %s52, %s53
      %p64 = scmp.eq.s32.totalorder %s18, 0
      %p65 = por %p63, %p64
      %p66 = scmp.ne.s32.totalorder %s52, %s53
      %p67 = scmp.eq.s32.totalorder %s19, 1
      %p68 = por %p66, %p67
      %p70 = scmp.ne.s32.totalorder %s53, %s69
      %p71 = scmp.eq.s32.totalorder %s19, 0
      %p72 = por %p70, %p71
      %p73 = scmp.le.s32.totalorder 1, %s13
      %p74 = scmp.lt.s32.totalorder %s13, 3
      %p75 = pnand %p73, %p74
      %p76 = pneg %p75
      // Predicated region
      $region9: #{tpu_custom_call.1} parent=5 // pred_check
        _
      $region10: #{tpu_custom_call.1} parent=5 // pred_check_branch
        %78 = sbr.rel (%p75) target = $region12
      $region11: #{tpu_custom_call.1} parent=5 // pred_region
        %s79 = ssub.s32 %s13, 1
      $region12: #{tpu_custom_call.1} parent=5 // pred_fallthru
        _
      %p80 = scmp.lt.s32.totalorder %s13, 2
      // Predicated region
      $region13: #{tpu_custom_call.1} parent=5 // pred_check
        %p81 = pneg %p80
      $region14: #{tpu_custom_call.1} parent=5 // pred_check_branch
        %83 = sbr.rel (%p81) target = $region16
      $region15: #{tpu_custom_call.1} parent=5 // pred_region
        // Predicated region
        $region17: #{tpu_custom_call.1} parent=15 // pred_check
          %p84 = pneg %p33
        $region18: #{tpu_custom_call.1} parent=15 // pred_check_branch
          %86 = sbr.rel (%p84) target = $region20
        $region19: #{tpu_custom_call.1} parent=15 // pred_region
          %s87 = sand.u32 %s23, 1
          %s88 = scalar_lea.sflag [#allocation3], %s87
          %s89 = sand.u32 %s23, 1
          %s90 = smul.addr %s89, 16
          %s91 = scalar_lea.vmem [#allocation2], %s90
          %s92 = smul.u32 2, %s13
          %s93 = ssub.s32 3, %s92
          %p94 = scmp.lt.s32.totalorder %s93, 2
          %s95 = scalar_select %p94, %s93, 2
          %s96 = smul.u32 128, %s95
          %s98 = ssub.s32 256, %s96
          %99 = vsyncadd %s88, %s98
          %p100 = scmp.ne.s32.totalorder 0, %s96
          %s101 = smul.addr %s92, 128
          %s102 = scalar_lea.hbm %s0, %s101
          %s103 = smul.u32 8, %s95
          %s104 = sshll.u32 %s91, 4
          %s105 = int_to_ptr.vmem [resolvable:$true] %s104
          %s106 = sshll.u32 %s103, 4
          %110 = dma.hbm_to_vmem [thread:$0]  (%p100), %s102, %s106, %s105, %s88, 128, 128, 8
        $region20: #{tpu_custom_call.1} parent=15 // pred_fallthru
          _
      $region16: #{tpu_custom_call.1} parent=5 // pred_fallthru
        _
      %p111 = scmp.le.s32.totalorder 1, %s13
      %p112 = scmp.lt.s32.totalorder %s13, 3
      %p113 = pnand %p111, %p112
      %p114 = pneg %p113
      // Predicated region
      $region21: #{tpu_custom_call.1} parent=5 // pred_check
        _
      $region22: #{tpu_custom_call.1} parent=5 // pred_check_branch
        %116 = sbr.rel (%p113) target = $region24
      $region23: #{tpu_custom_call.1} parent=5 // pred_region
        %s117 = ssub.s32 %s13, 1
        %s118 = sand.u32 %s26, 1
        %s119 = scalar_lea.sflag [#allocation3], %s118
        %s120 = sand.u32 %s26, 1
        %s121 = smul.addr %s120, 16
        %s122 = scalar_lea.vmem [#allocation2], %s121
        // Predicated region
        $region25: #{tpu_custom_call.1} parent=23 // pred_check
          %p123 = pneg %p39
        $region26: #{tpu_custom_call.1} parent=23 // pred_check_branch
          %125 = sbr.rel (%p123) target = $region28
        $region27: #{tpu_custom_call.1} parent=23 // pred_region
          %126 = dma.done %s119, 256
        $region28: #{tpu_custom_call.1} parent=23 // pred_fallthru
          _
        %s127 = sand.u32 %s26, 1
        %s128 = scalar_lea.sflag [#allocation3], %s127
        %s129 = sand.u32 %s26, 1
        %s130 = smul.addr %s129, 16
        %s131 = scalar_lea.vmem [#allocation2], %s130
        %p132 = pneg %p39
        %p133 = pneg %p36
        %p134 = pneg %p65
        %p135 = pneg %p62
        %s136 = sand.u32 %s52, 1
        %s137 = scalar_lea.sflag [#allocation4], %s136
        %s138 = sand.u32 %s52, 1
        %s139 = smul.addr %s138, 16
        %s140 = scalar_lea.vmem [#allocation5], %s139
        %s141 = smul.u32 2, %s18
        %s142 = ssub.s32 3, %s141
        %p143 = scmp.lt.s32.totalorder %s142, 2
        %s144 = scalar_select %p143, %s142, 2
        %s145 = smul.u32 128, %s144
        %s146 = smul.u32 2, %s18
        %s147 = ssub.s32 3, %s146
        %p148 = scmp.lt.s32.totalorder %s147, 2
        %s149 = scalar_select %p148, %s147, 2
        %s150 = smul.u32 128, %s149
        %v151 = vld [vmem:[%s122] sm:$0xff]
        %v152 = vld [vmem:[%s122 + $0x8] sm:$0xff]
        %v153 = vmul.f32 %v151, %v151
        %v154 = vmul.f32 %v152, %v152
        %155 = vadd.xlane.f32.xlu0 %v153
        %v156 = vpop.xlane.xlu0 %155
        %157 = vadd.xlane.f32.xlu0 %v154
        %v158 = vpop.xlane.xlu0 %157
        %v159 = vmax.f32 %v156, 1e-24
        %v160 = vmax.f32 %v158, 1e-24
        %v161 = vrsqrt.pop %v159
        %v162 = vrsqrt.pop %v160
        %v163 = vmul.f32 %v151, %v161
        %v164 = vmul.f32 %v152, %v162
        %165 = vst [vmem:[%s140] sm:$0xff] %v163
        %166 = vst [vmem:[%s140 + $0x8] sm:$0xff] %v164
        %s167 = sand.u32 %s52, 1
        %s168 = scalar_lea.sflag [#allocation4], %s167
        %s169 = sand.u32 %s52, 1
        %s170 = smul.addr %s169, 16
        %s171 = scalar_lea.vmem [#allocation5], %s170
        // Predicated region
        $region29: #{tpu_custom_call.1} parent=23 // pred_check
          %p172 = pneg %p62
        $region30: #{tpu_custom_call.1} parent=23 // pred_check_branch
          %174 = sbr.rel (%p172) target = $region32
        $region31: #{tpu_custom_call.1} parent=23 // pred_region
          %s175 = smul.u32 2, %s18
          %s176 = ssub.s32 3, %s175
          %p177 = scmp.lt.s32.totalorder %s176, 2
          %s178 = scalar_select %p177, %s176, 2
          %s179 = smul.u32 128, %s178
          %s181 = ssub.s32 256, %s179
          %182 = vsyncadd %s168, %s181
          %p183 = scmp.ne.s32.totalorder 0, %s179
          %s184 = smul.addr %s175, 128
          %s185 = scalar_lea.hbm %s1, %s184
          %s186 = smul.u32 8, %s178
          %s187 = sshll.u32 %s171, 4
          %s188 = int_to_ptr.vmem [resolvable:$true] %s187
          %s189 = sshll.u32 %s186, 4
          %193 = dma.vmem_to_hbm [thread:$0]  (%p183), %s188, %s189, %s185, %s168, 128, 128, 8
        $region32: #{tpu_custom_call.1} parent=23 // pred_fallthru
          _
      $region24: #{tpu_custom_call.1} parent=5 // pred_fallthru
        _
      %p194 = scmp.le.s32.totalorder 2, %s13
      // Predicated region
      $region33: #{tpu_custom_call.1} parent=5 // pred_check
        %p195 = pneg %p194
      $region34: #{tpu_custom_call.1} parent=5 // pred_check_branch
        %197 = sbr.rel (%p195) target = $region36
      $region35: #{tpu_custom_call.1} parent=5 // pred_region
        %s198 = ssub.s32 %s13, 2
        // Predicated region
        $region37: #{tpu_custom_call.1} parent=35 // pred_check
          %p199 = pneg %p68
        $region38: #{tpu_custom_call.1} parent=35 // pred_check_branch
          %201 = sbr.rel (%p199) target = $region40
        $region39: #{tpu_custom_call.1} parent=35 // pred_region
          %s202 = sand.u32 %s53, 1
          %s203 = scalar_lea.sflag [#allocation4], %s202
          %s204 = sand.u32 %s53, 1
          %s205 = smul.addr %s204, 16
          %s206 = scalar_lea.vmem [#allocation5], %s205
          %207 = dma.done %s203, 256
        $region40: #{tpu_custom_call.1} parent=35 // pred_fallthru
          _
      $region36: #{tpu_custom_call.1} parent=5 // pred_fallthru
        _
    $region6: #{tpu_custom_call.1} parent=1 // loop_footer
      %s17 = sadd.s32 1, %s13
    $region7: #{tpu_custom_call.1} parent=1 // loop_footer_branch
      %12 = sbr.rel target = $region3
    $region8: #{tpu_custom_call.1} parent=1 // loop_exit
      _
    %208 = vsyncpa [#allocation3], 1
    %s209 = scalar_lea.sflag [#allocation3], 1
    %210 = vsyncpa %s209, 1
    %211 = vsyncpa [#allocation4], 1
    %s212 = scalar_lea.sflag [#allocation4], 1
    %213 = vsyncpa %s212, 1

</llo_original>
